<compile_context>
chip_gen: v7x
topology: tpu7x:2x2x1
jax: 0.10.0
libtpu: 0.0.40
codegen_flags: <defaults>
</compile_context>

<pallas_src>
import functools

import jax
import jax.numpy as jnp
from jax.experimental import pallas as pl
from jax.experimental.pallas import tpu as pltpu

LANES = 128
SMOOTH = 1e-5


def _hybrid_loss_kernel(pred_ref, tgt_ref, acc_ref, *, n_inner, num_blocks,
                        tile_rows, n_full_rows, rem_lanes, may_be_ragged):
    o = pl.program_id(0)            # "parallel" axis (megacore on v7x)
    k = pl.program_id(1)            # "arbitrary" carried-reduction axis
    gt = o * n_inner + k            # unclamped global tile index

    # Output block (one per outer index) doubles as the carried accumulator:
    # acc[0,0]=sum(bce), acc[0,1]=sum(p*t), acc[0,2]=sum(p), acc[0,3]=sum(t),
    # each kept as an (8,128) vector partial.
    @pl.when(k == 0)
    def _init():
        acc_ref[...] = jnp.zeros_like(acc_ref)

    x = pred_ref[...].astype(jnp.float32)   # (tile_rows, 128)
    t = tgt_ref[...].astype(jnp.float32)

    nsub = tile_rows // 8

    def _reduce_rows(a):                     # (tile_rows,128) -> (8,128), VPU adds only
        if nsub == 1:
            return a
        return jnp.sum(a.reshape(nsub, 8, LANES), axis=0)

    def _accumulate(xv, tv, valid=None):
        xt = xv * tv
        # numerically stable BCE-with-logits: max(x,0) - x*t + log1p(exp(-|x|))
        bce = jnp.maximum(xv, 0.0) - xt + jnp.log1p(jnp.exp(-jnp.abs(xv)))
        if valid is not None:
            bce = jnp.where(valid, bce, 0.0)
        acc_ref[0, 0] += _reduce_rows(bce)
        acc_ref[0, 1] += _reduce_rows(xt)
        acc_ref[0, 2] += _reduce_rows(xv)
        acc_ref[0, 3] += _reduce_rows(tv)

    if may_be_ragged:
        # Only the boundary tile / clamped-repeat tiles pay for masking.
        is_clean = (gt + 1) * tile_rows <= n_full_rows

        @pl.when(is_clean)
        def _fast():
            _accumulate(x, t)

        @pl.when(jnp.logical_not(is_clean))
        def _masked():
            rows = jax.lax.broadcasted_iota(jnp.int32, x.shape, 0)
            grow = gt * tile_rows + rows     # global row index (no flat int32 overflow)
            valid = grow < n_full_rows
            if rem_lanes:
                cols = jax.lax.broadcasted_iota(jnp.int32, x.shape, 1)
                valid = valid | ((grow == n_full_rows) & (cols < rem_lanes))
            zero = jnp.zeros_like(x)
            _accumulate(jnp.where(valid, x, zero), jnp.where(valid, t, zero), valid)
    else:
        _accumulate(x, t)


def hybrid_loss(pred, target, *, tile_rows=4096, n_outer=2, smooth=SMOOTH):
    """HybridLoss(pred, target) -> scalar, matching the PyTorch module."""
    def _native(a):
        # keep bf16/f32 native in HBM (upcast per-tile in-kernel); others -> f32.
        if a.dtype in (jnp.dtype(jnp.float32), jnp.dtype(jnp.bfloat16)):
            return a.reshape(-1)
        return a.reshape(-1).astype(jnp.float32)

    pred_flat = _native(pred)
    tgt_flat = _native(target)
    n_valid = int(pred_flat.shape[0])
    assert int(tgt_flat.shape[0]) == n_valid

    # Lane-dense (rows, 128) view; pad at most to the next 128 multiple
    # (and to >= 8 rows).  When already aligned this is reshape-only (no copy).
    n_rows = max(-(-n_valid // LANES), 8)
    n_padded = n_rows * LANES
    if n_padded != n_valid:
        pred_flat = jnp.pad(pred_flat, (0, n_padded - n_valid))
        tgt_flat = jnp.pad(tgt_flat, (0, n_padded - n_valid))
    pred2d = pred_flat.reshape(n_rows, LANES)
    tgt2d = tgt_flat.reshape(n_rows, LANES)

    # Tile sizing: large tiles amortize per-step overhead; multiple of 32 when
    # possible (packed-dtype friendly).  Ragged last block handled in-kernel.
    tile_rows = max(8, (min(int(tile_rows), n_rows) // 8) * 8)
    if tile_rows >= 32:
        tile_rows = (tile_rows // 32) * 32

    num_blocks = -(-n_rows // tile_rows)
    n_outer = max(1, min(int(n_outer), num_blocks))   # parallel super-blocks
    n_inner = -(-num_blocks // n_outer)

    n_full_rows = n_valid // LANES
    rem_lanes = n_valid % LANES
    may_be_ragged = (num_blocks * tile_rows != n_full_rows) or \
                    (n_outer * n_inner != num_blocks)

    def tile_map(o, k):
        # Clamp over-range steps to the last real block; their contribution is
        # fully masked out in the kernel.
        return (jnp.minimum(o * n_inner + k, num_blocks - 1), 0)

    kernel = functools.partial(
        _hybrid_loss_kernel, n_inner=n_inner, num_blocks=num_blocks,
        tile_rows=tile_rows, n_full_rows=n_full_rows, rem_lanes=rem_lanes,
        may_be_ragged=may_be_ragged)

    partials = pl.pallas_call(
        kernel,
        out_shape=jax.ShapeDtypeStruct((n_outer, 4, 8, LANES), jnp.float32),
        grid_spec=pltpu.PrefetchScalarGridSpec(
            num_scalar_prefetch=0,
            grid=(n_outer, n_inner),
            in_specs=[pl.BlockSpec((tile_rows, LANES), tile_map),
                      pl.BlockSpec((tile_rows, LANES), tile_map)],
            out_specs=pl.BlockSpec((1, 4, 8, LANES), lambda o, k: (o, 0, 0, 0)),
        ),
        compiler_params=pltpu.CompilerParams(
            dimension_semantics=("parallel", "arbitrary")),
    )(pred2d, tgt2d)

    # Tiny final combine (n_outer * 4 * 8 * 128 floats) in plain JAX.
    sums = jnp.sum(partials, axis=(0, 2, 3))
    bce_mean = sums[0] / jnp.float32(n_valid)
    dice = (2.0 * sums[1] + smooth) / (sums[2] + sums[3] + smooth)
    return 0.5 * bce_mean + (1.0 - dice)


def ref_hybrid_loss(pred, target, smooth=SMOOTH):
    """Pure-JAX reference matching the PyTorch HybridLoss forward."""
    x = pred.reshape(-1).astype(jnp.float32)
    t = target.reshape(-1).astype(jnp.float32)
    bce = jnp.mean(jnp.maximum(x, 0.0) - x * t + jnp.log1p(jnp.exp(-jnp.abs(x))))
    inter = jnp.sum(x * t)
    union = jnp.sum(x) + jnp.sum(t)
    dice = (2.0 * inter + smooth) / (union + smooth)
    return 0.5 * bce + (1.0 - dice)


if __name__ == "__main__":
    key = jax.random.PRNGKey(0)
    k1, k2, k3, k4 = jax.random.split(key, 4)

    # UNet-style logits/targets: batch=2, channels=4, spatial=16x16 (2048 elems).
    pred = jax.random.normal(k1, (2, 4, 16, 16), jnp.float32)
    target = (jax.random.uniform(k2, (2, 4, 16, 16)) > 0.5).astype(jnp.float32)
    ref = jax.block_until_ready(ref_hybrid_loss(pred, target))

    # 1) Default config (single big tile at this size).
    out = jax.block_until_ready(hybrid_loss(pred, target))
    assert out.shape == (), out.shape
    assert jnp.allclose(out, ref, atol=1e-5, rtol=1e-5), (float(out), float(ref))

    # 2) Small tiles, single outer block -> exercises the carried inner accumulator.
    out2 = jax.block_until_ready(hybrid_loss(pred, target, tile_rows=8, n_outer=1))
    assert jnp.allclose(out2, ref, atol=1e-5, rtol=1e-5), (float(out2), float(ref))

    # 3) Ragged size (2495 elems, not a 128 multiple) with 2 outer blocks over
    #    3 tiles -> exercises edge-block masking and the clamped-repeat tile.
    pred3 = jax.random.normal(k3, (5, 499), jnp.float32)
    target3 = (jax.random.uniform(k4, (5, 499)) > 0.5).astype(jnp.float32)
    ref3 = jax.block_until_ready(ref_hybrid_loss(pred3, target3))
    out3 = jax.block_until_ready(hybrid_loss(pred3, target3, tile_rows=8, n_outer=2))
    assert jnp.allclose(out3, ref3, atol=1e-5, rtol=1e-5), (float(out3), float(ref3))

    print("KERNEL_OK")
</pallas_src>

<mosaic_0001>
module attributes {stable_mosaic.version = 11 : i64} {
  func.func @_hybrid_loss_kernel(%arg0: i32, %arg1: i32, %arg2: memref<16x128xf32, #tpu.memory_space<vmem>>, %arg3: memref<16x128xf32, #tpu.memory_space<vmem>>, %arg4: memref<1x4x8x128xf32, #tpu.memory_space<vmem>>) attributes {dimension_semantics = [#tpu.dimension_semantics<parallel>, #tpu.dimension_semantics<arbitrary>], iteration_bounds = array<i64: 1, 1>, scalar_prefetch = 0 : i64, scratch_operands = 0 : i64, tpu.core_type = #tpu.core_type<tc>, window_params = [{transform_indices = @transform_0, window_bounds = array<i64: 16, 128>}, {transform_indices = @transform_1, window_bounds = array<i64: 16, 128>}, {transform_indices = @transform_2, window_bounds = array<i64: 1, 4, 8, 128>}]} {
    %c0_i32 = arith.constant 0 : i32
    %0 = arith.cmpi eq, %arg1, %c0_i32 : i32
    %1 = arith.extui %0 : i1 to i32
    %c0_i32_0 = arith.constant 0 : i32
    %2 = arith.cmpi ne, %1, %c0_i32_0 : i32
    scf.if %2 {
      %cst_38 = arith.constant 0.000000e+00 : f32
      %47 = vector.broadcast %cst_38 : f32 to vector<1x4x8x128xf32>
      %c0_39 = arith.constant 0 : index
      %c0_40 = arith.constant 0 : index
      %c0_41 = arith.constant 0 : index
      %c0_42 = arith.constant 0 : index
      %48 = vector.load %arg4[%c0_39, %c0_40, %c0_41, %c0_42] : memref<1x4x8x128xf32, #tpu.memory_space<vmem>>, vector<1x4x8x128xf32>
      tpu.vector_store %arg4[%c0_39, %c0_40, %c0_41, %c0_42], %47 {strides = array<i32>} : memref<1x4x8x128xf32, #tpu.memory_space<vmem>>, vector<1x4x8x128xf32>,
    } else {
    }
    %c0 = arith.constant 0 : index
    %c0_1 = arith.constant 0 : index
    %3 = vector.load %arg2[%c0, %c0_1] : memref<16x128xf32, #tpu.memory_space<vmem>>, vector<16x128xf32>
    %c0_2 = arith.constant 0 : index
    %c0_3 = arith.constant 0 : index
    %4 = vector.load %arg3[%c0_2, %c0_3] : memref<16x128xf32, #tpu.memory_space<vmem>>, vector<16x128xf32>
    %5 = arith.mulf %3, %4 : vector<16x128xf32>
    %cst = arith.constant 0.000000e+00 : f32
    %6 = vector.broadcast %cst : f32 to vector<16x128xf32>
    %7 = arith.maximumf %3, %6 : vector<16x128xf32>
    %8 = arith.subf %7, %5 : vector<16x128xf32>
    %9 = math.absf %3 : vector<16x128xf32>
    %cst_4 = arith.constant 0.000000e+00 : f32
    %10 = vector.broadcast %cst_4 : f32 to vector<16x128xf32>
    %11 = arith.subf %10, %9 : vector<16x128xf32>
    %12 = math.exp %11 : vector<16x128xf32>
    %13 = math.log1p %12 : vector<16x128xf32>
    %14 = arith.addf %8, %13 : vector<16x128xf32>
    %c0_5 = arith.constant 0 : index
    %c0_6 = arith.constant 0 : index
    %c0_7 = arith.constant 0 : index
    %c0_8 = arith.constant 0 : index
    %15 = vector.load %arg4[%c0_5, %c0_6, %c0_7, %c0_8] : memref<1x4x8x128xf32, #tpu.memory_space<vmem>>, vector<1x1x8x128xf32>
    %16 = vector.shape_cast %15 : vector<1x1x8x128xf32> to vector<8x128xf32>
    %17 = vector.shape_cast %14 : vector<16x128xf32> to vector<2x8x128xf32>
    %cst_9 = arith.constant dense<0.000000e+00> : vector<8x128xf32>
    %18 = vector.multi_reduction <add>, %17, %cst_9 [0] : vector<2x8x128xf32> to vector<8x128xf32>
    %19 = arith.addf %16, %18 : vector<8x128xf32>
    %c0_10 = arith.constant 0 : index
    %c0_11 = arith.constant 0 : index
    %c0_12 = arith.constant 0 : index
    %c0_13 = arith.constant 0 : index
    %20 = vector.load %arg4[%c0_10, %c0_11, %c0_12, %c0_13] : memref<1x4x8x128xf32, #tpu.memory_space<vmem>>, vector<1x1x8x128xf32>
    %21 = vector.shape_cast %20 : vector<1x1x8x128xf32> to vector<8x128xf32>
    %22 = vector.shape_cast %19 : vector<8x128xf32> to vector<1x1x8x128xf32>
    tpu.vector_store %arg4[%c0_10, %c0_11, %c0_12, %c0_13], %22 {strides = array<i32>} : memref<1x4x8x128xf32, #tpu.memory_space<vmem>>, vector<1x1x8x128xf32>,
    %c0_14 = arith.constant 0 : index
    %c1 = arith.constant 1 : index
    %c0_15 = arith.constant 0 : index
    %c0_16 = arith.constant 0 : index
    %23 = vector.load %arg4[%c0_14, %c1, %c0_15, %c0_16] : memref<1x4x8x128xf32, #tpu.memory_space<vmem>>, vector<1x1x8x128xf32>
    %24 = vector.shape_cast %23 : vector<1x1x8x128xf32> to vector<8x128xf32>
    %25 = vector.shape_cast %5 : vector<16x128xf32> to vector<2x8x128xf32>
    %cst_17 = arith.constant dense<0.000000e+00> : vector<8x128xf32>
    %26 = vector.multi_reduction <add>, %25, %cst_17 [0] : vector<2x8x128xf32> to vector<8x128xf32>
    %27 = arith.addf %24, %26 : vector<8x128xf32>
    %c0_18 = arith.constant 0 : index
    %c1_19 = arith.constant 1 : index
    %c0_20 = arith.constant 0 : index
    %c0_21 = arith.constant 0 : index
    %28 = vector.load %arg4[%c0_18, %c1_19, %c0_20, %c0_21] : memref<1x4x8x128xf32, #tpu.memory_space<vmem>>, vector<1x1x8x128xf32>
    %29 = vector.shape_cast %28 : vector<1x1x8x128xf32> to vector<8x128xf32>
    %30 = vector.shape_cast %27 : vector<8x128xf32> to vector<1x1x8x128xf32>
    tpu.vector_store %arg4[%c0_18, %c1_19, %c0_20, %c0_21], %30 {strides = array<i32>} : memref<1x4x8x128xf32, #tpu.memory_space<vmem>>, vector<1x1x8x128xf32>,
    %c0_22 = arith.constant 0 : index
    %c2 = arith.constant 2 : index
    %c0_23 = arith.constant 0 : index
    %c0_24 = arith.constant 0 : index
    %31 = vector.load %arg4[%c0_22, %c2, %c0_23, %c0_24] : memref<1x4x8x128xf32, #tpu.memory_space<vmem>>, vector<1x1x8x128xf32>
    %32 = vector.shape_cast %31 : vector<1x1x8x128xf32> to vector<8x128xf32>
    %33 = vector.shape_cast %3 : vector<16x128xf32> to vector<2x8x128xf32>
    %cst_25 = arith.constant dense<0.000000e+00> : vector<8x128xf32>
    %34 = vector.multi_reduction <add>, %33, %cst_25 [0] : vector<2x8x128xf32> to vector<8x128xf32>
    %35 = arith.addf %32, %34 : vector<8x128xf32>
    %c0_26 = arith.constant 0 : index
    %c2_27 = arith.constant 2 : index
    %c0_28 = arith.constant 0 : index
    %c0_29 = arith.constant 0 : index
    %36 = vector.load %arg4[%c0_26, %c2_27, %c0_28, %c0_29] : memref<1x4x8x128xf32, #tpu.memory_space<vmem>>, vector<1x1x8x128xf32>
    %37 = vector.shape_cast %36 : vector<1x1x8x128xf32> to vector<8x128xf32>
    %38 = vector.shape_cast %35 : vector<8x128xf32> to vector<1x1x8x128xf32>
    tpu.vector_store %arg4[%c0_26, %c2_27, %c0_28, %c0_29], %38 {strides = array<i32>} : memref<1x4x8x128xf32, #tpu.memory_space<vmem>>, vector<1x1x8x128xf32>,
    %c0_30 = arith.constant 0 : index
    %c3 = arith.constant 3 : index
    %c0_31 = arith.constant 0 : index
    %c0_32 = arith.constant 0 : index
    %39 = vector.load %arg4[%c0_30, %c3, %c0_31, %c0_32] : memref<1x4x8x128xf32, #tpu.memory_space<vmem>>, vector<1x1x8x128xf32>
    %40 = vector.shape_cast %39 : vector<1x1x8x128xf32> to vector<8x128xf32>
    %41 = vector.shape_cast %4 : vector<16x128xf32> to vector<2x8x128xf32>
    %cst_33 = arith.constant dense<0.000000e+00> : vector<8x128xf32>
    %42 = vector.multi_reduction <add>, %41, %cst_33 [0] : vector<2x8x128xf32> to vector<8x128xf32>
    %43 = arith.addf %40, %42 : vector<8x128xf32>
    %c0_34 = arith.constant 0 : index
    %c3_35 = arith.constant 3 : index
    %c0_36 = arith.constant 0 : index
    %c0_37 = arith.constant 0 : index
    %44 = vector.load %arg4[%c0_34, %c3_35, %c0_36, %c0_37] : memref<1x4x8x128xf32, #tpu.memory_space<vmem>>, vector<1x1x8x128xf32>
    %45 = vector.shape_cast %44 : vector<1x1x8x128xf32> to vector<8x128xf32>
    %46 = vector.shape_cast %43 : vector<8x128xf32> to vector<1x1x8x128xf32>
    tpu.vector_store %arg4[%c0_34, %c3_35, %c0_36, %c0_37], %46 {strides = array<i32>} : memref<1x4x8x128xf32, #tpu.memory_space<vmem>>, vector<1x1x8x128xf32>,
    return
  }
  func.func @transform_0(%arg0: i32, %arg1: i32) -> (i32, i32) {
    %c1_i32 = arith.constant 1 : i32
    %0 = arith.muli %arg0, %c1_i32 : i32
    %1 = arith.addi %0, %arg1 : i32
    %c0_i32 = arith.constant 0 : i32
    %2 = arith.minsi %1, %c0_i32 : i32
    %c0_i32_0 = arith.constant 0 : i32
    %c0_i32_1 = arith.constant 0 : i32
    return %2, %c0_i32_0 : i32, i32
  }
  func.func @transform_1(%arg0: i32, %arg1: i32) -> (i32, i32) {
    %c1_i32 = arith.constant 1 : i32
    %0 = arith.muli %arg0, %c1_i32 : i32
    %1 = arith.addi %0, %arg1 : i32
    %c0_i32 = arith.constant 0 : i32
    %2 = arith.minsi %1, %c0_i32 : i32
    %c0_i32_0 = arith.constant 0 : i32
    %c0_i32_1 = arith.constant 0 : i32
    return %2, %c0_i32_0 : i32, i32
  }
  func.func @transform_2(%arg0: i32, %arg1: i32) -> (i32, i32, i32, i32) {
    %c0_i32 = arith.constant 0 : i32
    %c0_i32_0 = arith.constant 0 : i32
    %c0_i32_1 = arith.constant 0 : i32
    %c0_i32_2 = arith.constant 0 : i32
    return %arg0, %c0_i32, %c0_i32_0, %c0_i32_1 : i32, i32, i32, i32
  }
}

</mosaic_0001>

<llo_original>
// kernel: tpu_custom_call.1
$region0: #{tpu_custom_call.1}
  #allocation0 [shape = 'u32[]', space=smem, size = 0x4, offset = 0x4, fixed_abs, tag = 'smem constant byte address 0x4 - core index']
  #allocation1 [shape = 'u32[144,128]{1,0:T(1,128)}', space=vmem, size = 0x12000, scoped, tag = 'internal scratch']
  %s0 = inlined_call_operand.hbm [shape: f32[16,128], index: 0, kind: input, shape index: {}]
  %s1 = inlined_call_operand.hbm [shape: f32[16,128], index: 1, kind: input, shape index: {}]
  %s2 = inlined_call_operand.hbm [shape: f32[1,4,8,128], index: 2, kind: output, shape index: {}]
  %s3 = sld [smem:[#allocation0]]
  $region30: #{tpu_custom_call.1} parent=0
    _
  %s5 = ssub.s32 1, %s3
  %s6 = scalar_select 0, %s5, %s3
  $region1: #{tpu_custom_call.1} parent=0
    #allocation2 [shape = 'u8[8192]{0}', space=vmem, size = 0x2000, scoped, tag = 'input window, operand 0, single buffered']
    #allocation3 [shape = 's32[1]{0}', space=sflag, size = 0x4, scoped, tag = 'scoped memory for tpu_custom_call.1']
    #allocation4 [shape = 's32[1]{0}', space=sflag, size = 0x4, scoped, tag = 'scoped memory for tpu_custom_call.1']
    #allocation5 [shape = 'u8[8192]{0}', space=vmem, size = 0x2000, scoped, tag = 'input window, operand 1, single buffered']
    #allocation6 [shape = 's32[1]{0}', space=sflag, size = 0x4, scoped, tag = 'scoped memory for tpu_custom_call.1']
    #allocation7 [shape = 'u8[16384]{0}', space=vmem, size = 0x4000, scoped, tag = 'output window, operand 0, single buffered']
    %7 = vsyncpa [#allocation3], 0
    %8 = vsyncpa [#allocation6], 0
    %9 = vsyncpa [#allocation4], 0
    // Predicated region
    $region2: #{tpu_custom_call.1} parent=1 // pred_check
      _
    $region3: #{tpu_custom_call.1} parent=1 // pred_check_branch
      %11 = sbr.rel (0) target = $region5
    $region4: #{tpu_custom_call.1} parent=1 // pred_region
      %s12 = sadd.s32 0, 0
      %p13 = scmp.lt.s32.totalorder %s12, 0
      %s14 = scalar_select %p13, %s12, 0
      %s15 = smul.u32 2, %s14
      %s17 = ssub.s32 256, 256
      %18 = vsyncadd [#allocation3], %s17
      %s19 = smul.addr %s15, 128
      %s20 = scalar_lea.hbm %s0, %s19
      %s21 = sshll.u32 [#allocation2], 4
      %s22 = int_to_ptr.vmem [resolvable:$true] %s21
      %27 = dma.hbm_to_vmem [thread:$0]  %s20, 256, %s22, [#allocation3], 128, 128, 8
    $region5: #{tpu_custom_call.1} parent=1 // pred_fallthru
      _
    // Predicated region
    $region6: #{tpu_custom_call.1} parent=1 // pred_check
      _
    $region7: #{tpu_custom_call.1} parent=1 // pred_check_branch
      %29 = sbr.rel (0) target = $region9
    $region8: #{tpu_custom_call.1} parent=1 // pred_region
      %s30 = sadd.s32 0, 0
      %p31 = scmp.lt.s32.totalorder %s30, 0
      %s32 = scalar_select %p31, %s30, 0
      %s33 = smul.u32 2, %s32
      %s35 = ssub.s32 256, 256
      %36 = vsyncadd [#allocation6], %s35
      %s37 = smul.addr %s33, 128
      %s38 = scalar_lea.hbm %s1, %s37
      %s39 = sshll.u32 [#allocation5], 4
      %s40 = int_to_ptr.vmem [resolvable:$true] %s39
      %45 = dma.hbm_to_vmem [thread:$0]  %s38, 256, %s40, [#allocation6], 128, 128, 8
    $region9: #{tpu_custom_call.1} parent=1 // pred_fallthru
      _
    // Predicated region
    $region10: #{tpu_custom_call.1} parent=1 // pred_check
      _
    $region11: #{tpu_custom_call.1} parent=1 // pred_check_branch
      %47 = sbr.rel (0) target = $region13
    $region12: #{tpu_custom_call.1} parent=1 // pred_region
      %48 = dma.done [#allocation3], 256
    $region13: #{tpu_custom_call.1} parent=1 // pred_fallthru
      _
    // Predicated region
    $region14: #{tpu_custom_call.1} parent=1 // pred_check
      _
    $region15: #{tpu_custom_call.1} parent=1 // pred_check_branch
      %50 = sbr.rel (0) target = $region17
    $region16: #{tpu_custom_call.1} parent=1 // pred_region
      %51 = dma.done [#allocation6], 256
    $region17: #{tpu_custom_call.1} parent=1 // pred_fallthru
      _
    %s52 = sadd.s32 0, 0
    %p53 = scmp.lt.s32.totalorder %s52, 0
    %s54 = scalar_select %p53, %s52, 0
    %s55 = smul.u32 2, %s54
    %s56 = sadd.s32 0, 0
    %p57 = scmp.lt.s32.totalorder %s56, 0
    %s58 = scalar_select %p57, %s56, 0
    %s59 = smul.u32 2, %s58
    %p60 = scmp.eq.s32.totalorder 0, 0
    // Predicated region
    $region18: #{tpu_custom_call.1} parent=1 // pred_check
      %p61 = pneg %p60
    $region19: #{tpu_custom_call.1} parent=1 // pred_check_branch
      %63 = sbr.rel (%p61) target = $region21
    $region20: #{tpu_custom_call.1} parent=1 // pred_region
      %64 = vst [vmem:[#allocation7] sm:$0xff] 0.0
      %65 = vst [vmem:[#allocation7 + $0x8] sm:$0xff] 0.0
      %66 = vst [vmem:[#allocation7 + $0x10] sm:$0xff] 0.0
      %67 = vst [vmem:[#allocation7 + $0x18] sm:$0xff] 0.0
    $region21: #{tpu_custom_call.1} parent=1 // pred_fallthru
      _
    %v68 = vld [vmem:[#allocation2] sm:$0xff]
    %v69 = vld [vmem:[#allocation2 + $0x8] sm:$0xff]
    %v70 = vld [vmem:[#allocation5] sm:$0xff]
    %v71 = vld [vmem:[#allocation5 + $0x8] sm:$0xff]
    %v72 = vmul.f32 %v68, %v70
    %v73 = vmul.f32 %v69, %v71
    %v74 = vmax.f32 %v68, 0.0
    %v75 = vmax.f32 %v69, 0.0
    %v76 = vsub.f32 %v74, %v72
    %v77 = vsub.f32 %v75, %v73
    %v78 = vand.u32 2147483647, %v68
    %v79 = vand.u32 2147483647, %v69
    %v80 = vsub.f32 0.0, %v78
    %v81 = vsub.f32 0.0, %v79
    %v82 = vmul.f32 %v80, 1.442695
    %v83 = vpow.pop %v82
    %v84 = vmul.f32 %v81, 1.442695
    %v85 = vpow.pop %v84
    %v86 = vadd.f32 %v83, 1.0
    %v87 = vlog2.pop %v86
    %v88 = vmul.f32 %v87, 0.6931472
    %v89 = vmul.f32 -0.5, %v83
    %v90 = vadd.f32 %v89, 1.0
    %v91 = vmul.f32 %v90, %v83
    %v92 = vand.u32 2147483647, %v83
    %vm93 = vcmp.lt.f32.partialorder %v92, 0.0004427343
    %v94 = vsel %vm93, %v91, %v88
    %v95 = vadd.f32 %v85, 1.0
    %v96 = vlog2.pop %v95
    %v97 = vmul.f32 %v96, 0.6931472
    %v98 = vmul.f32 -0.5, %v85
    %v99 = vadd.f32 %v98, 1.0
    %v100 = vmul.f32 %v99, %v85
    %v101 = vand.u32 2147483647, %v85
    %vm102 = vcmp.lt.f32.partialorder %v101, 0.0004427343
    %v103 = vsel %vm102, %v100, %v97
    %v104 = vadd.f32 %v76, %v94
    %v105 = vadd.f32 %v77, %v103
    %v106 = vld [vmem:[#allocation7] sm:$0xff]
    %v107 = vadd.f32 %v104, %v105
    %v108 = vadd.f32 %v106, %v107
    %109 = vst [vmem:[#allocation7] sm:$0xff] %v108
    %s110 = scalar_lea.vmem [#allocation7], 8
    %v111 = vld [vmem:[%s110] sm:$0xff]
    %v112 = vadd.f32 %v72, %v73
    %v113 = vadd.f32 %v111, %v112
    %114 = vst [vmem:[%s110] sm:$0xff] %v113
    %s115 = scalar_lea.vmem [#allocation7], 16
    %v116 = vld [vmem:[%s115] sm:$0xff]
    %v117 = vadd.f32 %v68, %v69
    %v118 = vadd.f32 %v116, %v117
    %119 = vst [vmem:[%s115] sm:$0xff] %v118
    %s120 = scalar_lea.vmem [#allocation7], 24
    %v121 = vld [vmem:[%s120] sm:$0xff]
    %v122 = vadd.f32 %v70, %v71
    %v123 = vadd.f32 %v121, %v122
    %124 = vst [vmem:[%s120] sm:$0xff] %v123
    // Predicated region
    $region22: #{tpu_custom_call.1} parent=1 // pred_check
      _
    $region23: #{tpu_custom_call.1} parent=1 // pred_check_branch
      %126 = sbr.rel (0) target = $region25
    $region24: #{tpu_custom_call.1} parent=1 // pred_region
      %s128 = ssub.s32 512, 512
      %129 = vsyncadd [#allocation4], %s128
      %s130 = sshll.u32 [#allocation7], 4
      %s131 = int_to_ptr.vmem [resolvable:$true] %s130
      %136 = dma.vmem_to_hbm [thread:$0]  %s131, 512, %s2, [#allocation4], 128, 128, 8
    $region25: #{tpu_custom_call.1} parent=1 // pred_fallthru
      _
    // Predicated region
    $region26: #{tpu_custom_call.1} parent=1 // pred_check
      _
    $region27: #{tpu_custom_call.1} parent=1 // pred_check_branch
      %138 = sbr.rel (0) target = $region29
    $region28: #{tpu_custom_call.1} parent=1 // pred_region
      %139 = dma.done [#allocation4], 512
    $region29: #{tpu_custom_call.1} parent=1 // pred_fallthru
      _
    %140 = vsyncpa [#allocation3], 1
    %141 = vsyncpa [#allocation6], 1
    %142 = vsyncpa [#allocation4], 1

</llo_original>
